<compile_context>
chip_gen: v5e
topology: v5e:2x2
jax: 0.10.0
libtpu: 0.0.40
codegen_flags: <defaults>
</compile_context>

<pallas_src>
import functools

import jax
import jax.numpy as jnp
from jax.experimental import pallas as pl
from jax.experimental.pallas import tpu as pltpu


def _lstm_recurrence_kernel(gx_ref, w_hh_ref, h_out_ref, h_scr, c_scr, *,
                            hidden, chunk):
    """One grid step = one (batch-tile, time-chunk); fori_loop runs `chunk` steps.

    gx_ref    : (chunk, TB, 4H)  precomputed x@W_ih^T + (b_ih+b_hh), time-major
    w_hh_ref  : (H, 4H)          hidden->gates weights (transposed)
    h_out_ref : (TB, H)          final hidden state (written on the last time chunk)
    h_scr,c_scr : (TB, H)        VMEM scratch carrying the recurrent state
    """
    s = pl.program_id(1)  # time-chunk index (axis 0 is the batch tile)

    @pl.when(s == 0)
    def _():
        h_scr[...] = jnp.zeros_like(h_scr)
        c_scr[...] = jnp.zeros_like(c_scr)

    w_hh = w_hh_ref[...]  # read once; reused by every step of the loop

    def step(t, carry):
        h, c = carry
        # Only this (TB,H)x(H,4H) matmul is on the serial critical path now.
        gates = gx_ref[t] + jnp.dot(h, w_hh, preferred_element_type=jnp.float32)
        i_g = jax.nn.sigmoid(gates[:, 0 * hidden:1 * hidden])
        f_g = jax.nn.sigmoid(gates[:, 1 * hidden:2 * hidden])
        g_g = jnp.tanh(gates[:, 2 * hidden:3 * hidden])
        o_g = jax.nn.sigmoid(gates[:, 3 * hidden:4 * hidden])
        c_new = f_g * c + i_g * g_g
        h_new = o_g * jnp.tanh(c_new)
        return h_new, c_new

    h_fin, c_fin = jax.lax.fori_loop(0, chunk, step,
                                     (h_scr[...], c_scr[...]),
                                     unroll=chunk <= 16)
    h_scr[...] = h_fin
    c_scr[...] = c_fin

    @pl.when(s == pl.num_programs(1) - 1)
    def _():
        h_out_ref[...] = h_fin


def _pick_chunk(total, max_chunk=128):
    """Largest divisor of `total` that is <= max_chunk (time steps per grid step)."""
    for c in range(min(total, max_chunk), 0, -1):
        if total % c == 0:
            return c
    return total


def lstm_forward(x, w_ih_t, w_hh_t, b_gates, w_out_t, b_out):
    """x: (B, T, I) float32  ->  predictions: (B, O) float32."""
    B, T, I = x.shape
    H = w_hh_t.shape[0]

    # Hoisted input projection: one big (T*B, I) x (I, 4H) matmul (no recurrence
    # dependency), emitted time-major so the kernel indexes gx[t] on the leading axis.
    gx = jnp.einsum('bti,ig->tbg', x, w_ih_t,
                    preferred_element_type=jnp.float32) + b_gates   # (T, B, 4H)

    chunk = _pick_chunk(T)          # time steps handled per grid iteration (VMEM-sized)
    n_chunks = T // chunk
    tb = B                          # batch tile; B is tiny here -> a single tile

    kernel = functools.partial(_lstm_recurrence_kernel, hidden=H, chunk=chunk)

    h_final = pl.pallas_call(
        kernel,
        out_shape=jax.ShapeDtypeStruct((B, H), jnp.float32),
        grid_spec=pltpu.PrefetchScalarGridSpec(
            num_scalar_prefetch=0,
            grid=(B // tb, n_chunks),                                 # (batch, time)
            in_specs=[
                pl.BlockSpec((chunk, tb, 4 * H), lambda b, s: (s, b, 0)),  # gx chunk
                pl.BlockSpec((H, 4 * H), lambda b, s: (0, 0)),             # W_hh^T
            ],
            out_specs=pl.BlockSpec((tb, H), lambda b, s: (b, 0)),
            scratch_shapes=[
                pltpu.VMEM((tb, H), jnp.float32),   # hidden-state carry
                pltpu.VMEM((tb, H), jnp.float32),   # cell-state carry
            ],
        ),
        compiler_params=pltpu.CompilerParams(
            # batch rows are independent (megacore-shardable on v7x);
            # the time-chunk axis is a true recurrence and must run in order.
            dimension_semantics=("parallel", "arbitrary")),
    )(gx, w_hh_t)

    # Final Linear kept outside the recurrent kernel (O=1 would be a lane-sparse store).
    return jnp.dot(h_final, w_out_t, preferred_element_type=jnp.float32) + b_out


def _reference_lstm(x, w_ih_t, w_hh_t, b_gates, w_out_t, b_out, hidden):
    """Pure-JAX reference replicating the PyTorch forward exactly."""
    B, T, _ = x.shape
    h = jnp.zeros((B, hidden), jnp.float32)
    c = jnp.zeros((B, hidden), jnp.float32)
    for t in range(T):
        gates = x[:, t, :] @ w_ih_t + h @ w_hh_t + b_gates
        i_g = jax.nn.sigmoid(gates[:, 0 * hidden:1 * hidden])
        f_g = jax.nn.sigmoid(gates[:, 1 * hidden:2 * hidden])
        g_g = jnp.tanh(gates[:, 2 * hidden:3 * hidden])
        o_g = jax.nn.sigmoid(gates[:, 3 * hidden:4 * hidden])
        c = f_g * c + i_g * g_g
        h = o_g * jnp.tanh(c)
    return h @ w_out_t + b_out


if __name__ == "__main__":
    input_size = 1
    hidden_size = 8
    output_size = 1
    batch = 4
    seq_len = 8

    key = jax.random.PRNGKey(0)
    keys = jax.random.split(key, 8)
    k = 1.0 / jnp.sqrt(hidden_size)  # PyTorch-style uniform(-1/sqrt(H), 1/sqrt(H))

    # Parameters (deterministic, in-script). Stored pre-transposed for jnp.dot.
    w_ih = jax.random.uniform(keys[0], (4 * hidden_size, input_size), jnp.float32, -k, k)
    w_hh = jax.random.uniform(keys[1], (4 * hidden_size, hidden_size), jnp.float32, -k, k)
    b_ih = jax.random.uniform(keys[2], (4 * hidden_size,), jnp.float32, -k, k)
    b_hh = jax.random.uniform(keys[3], (4 * hidden_size,), jnp.float32, -k, k)
    w_lin = jax.random.uniform(keys[4], (output_size, hidden_size), jnp.float32, -k, k)
    b_lin = jax.random.uniform(keys[5], (output_size,), jnp.float32, -k, k)

    w_ih_t = w_ih.T                                  # (I, 4H)
    w_hh_t = w_hh.T                                  # (H, 4H)
    b_gates = (b_ih + b_hh).reshape(1, 4 * hidden_size)
    w_out_t = w_lin.T                                # (H, O)
    b_out = b_lin.reshape(1, output_size)

    # Input sequence (batch, seq, input_size) — same layout as the PyTorch module.
    x = jax.random.normal(keys[6], (batch, seq_len, input_size), jnp.float32)

    preds = lstm_forward(x, w_ih_t, w_hh_t, b_gates, w_out_t, b_out)
    preds = jax.block_until_ready(preds)

    ref = _reference_lstm(x, w_ih_t, w_hh_t, b_gates, w_out_t, b_out, hidden_size)
    assert preds.shape == (batch, output_size)
    assert jnp.max(jnp.abs(preds - ref)) < 1e-5

    print("KERNEL_OK")
</pallas_src>

<mosaic_0001>
module attributes {stable_mosaic.version = 11 : i64} {
  func.func @_lstm_recurrence_kernel(%arg0: i32, %arg1: i32, %arg2: memref<8x4x32xf32, #tpu.memory_space<vmem>>, %arg3: memref<8x32xf32, #tpu.memory_space<vmem>>, %arg4: memref<4x8xf32, #tpu.memory_space<vmem>>, %arg5: memref<4x8xf32, #tpu.memory_space<vmem>>, %arg6: memref<4x8xf32, #tpu.memory_space<vmem>>) attributes {dimension_semantics = [#tpu.dimension_semantics<parallel>, #tpu.dimension_semantics<arbitrary>], iteration_bounds = array<i64: 1, 1>, scalar_prefetch = 0 : i64, scratch_operands = 2 : i64, tpu.core_type = #tpu.core_type<tc>, window_params = [{transform_indices = @transform_0, window_bounds = array<i64: 8, 4, 32>}, {pipeline_mode = #tpu.pipeline_mode<synchronous>, transform_indices = @transform_1, window_bounds = array<i64: 8, 32>}, {transform_indices = @transform_2, window_bounds = array<i64: 4, 8>}]} {
    %c0_i32 = arith.constant 0 : i32
    %0 = arith.cmpi eq, %arg1, %c0_i32 : i32
    %1 = arith.extui %0 : i1 to i32
    %c0_i32_0 = arith.constant 0 : i32
    %2 = arith.cmpi ne, %1, %c0_i32_0 : i32
    scf.if %2 {
      %cst_60 = arith.constant 0.000000e+00 : f32
      %251 = vector.broadcast %cst_60 : f32 to vector<4x8xf32>
      %c0_61 = arith.constant 0 : index
      %c0_62 = arith.constant 0 : index
      %252 = vector.load %arg5[%c0_61, %c0_62] : memref<4x8xf32, #tpu.memory_space<vmem>>, vector<4x8xf32>
      tpu.vector_store %arg5[%c0_61, %c0_62], %251 {strides = array<i32>} : memref<4x8xf32, #tpu.memory_space<vmem>>, vector<4x8xf32>,
      %cst_63 = arith.constant 0.000000e+00 : f32
      %253 = vector.broadcast %cst_63 : f32 to vector<4x8xf32>
      %c0_64 = arith.constant 0 : index
      %c0_65 = arith.constant 0 : index
      %254 = vector.load %arg6[%c0_64, %c0_65] : memref<4x8xf32, #tpu.memory_space<vmem>>, vector<4x8xf32>
      tpu.vector_store %arg6[%c0_64, %c0_65], %253 {strides = array<i32>} : memref<4x8xf32, #tpu.memory_space<vmem>>, vector<4x8xf32>,
    } else {
    }
    %c0 = arith.constant 0 : index
    %c0_1 = arith.constant 0 : index
    %3 = vector.load %arg3[%c0, %c0_1] : memref<8x32xf32, #tpu.memory_space<vmem>>, vector<8x32xf32>
    %c0_2 = arith.constant 0 : index
    %c0_3 = arith.constant 0 : index
    %4 = vector.load %arg5[%c0_2, %c0_3] : memref<4x8xf32, #tpu.memory_space<vmem>>, vector<4x8xf32>
    %c0_4 = arith.constant 0 : index
    %c0_5 = arith.constant 0 : index
    %5 = vector.load %arg6[%c0_4, %c0_5] : memref<4x8xf32, #tpu.memory_space<vmem>>, vector<4x8xf32>
    %c0_i32_6 = arith.constant 0 : i32
    %6 = arith.index_cast %c0_i32_6 : i32 to index
    %c0_7 = arith.constant 0 : index
    %c0_8 = arith.constant 0 : index
    %7 = vector.load %arg2[%6, %c0_7, %c0_8] : memref<8x4x32xf32, #tpu.memory_space<vmem>>, vector<1x4x32xf32>
    %8 = vector.shape_cast %7 : vector<1x4x32xf32> to vector<4x32xf32>
    %cst = arith.constant dense<0.000000e+00> : vector<4x32xf32>
    %9 = tpu.matmul %4, %3, %cst {dimension_numbers = #tpu.dot_dimension_numbers<[1], [0], [0], [1], [0, 0, 1, 1], [], []>} : vector<4x8xf32>, vector<8x32xf32>, vector<4x32xf32> -> vector<4x32xf32>
    %10 = arith.addf %8, %9 : vector<4x32xf32>
    %11 = vector.extract_strided_slice %10 {offsets = [0, 0], sizes = [4, 8], strides = [1, 1]} : vector<4x32xf32> to vector<4x8xf32>
    %12 = arith.negf %11 : vector<4x8xf32>
    %13 = math.exp %12 : vector<4x8xf32>
    %cst_9 = arith.constant 1.000000e+00 : f32
    %14 = vector.broadcast %cst_9 : f32 to vector<4x8xf32>
    %15 = arith.addf %14, %13 : vector<4x8xf32>
    %16 = arith.divf %14, %15 : vector<4x8xf32>
    %17 = vector.extract_strided_slice %10 {offsets = [0, 8], sizes = [4, 8], strides = [1, 1]} : vector<4x32xf32> to vector<4x8xf32>
    %18 = arith.negf %17 : vector<4x8xf32>
    %19 = math.exp %18 : vector<4x8xf32>
    %cst_10 = arith.constant 1.000000e+00 : f32
    %20 = vector.broadcast %cst_10 : f32 to vector<4x8xf32>
    %21 = arith.addf %20, %19 : vector<4x8xf32>
    %22 = arith.divf %20, %21 : vector<4x8xf32>
    %23 = vector.extract_strided_slice %10 {offsets = [0, 16], sizes = [4, 8], strides = [1, 1]} : vector<4x32xf32> to vector<4x8xf32>
    %24 = math.tanh %23 : vector<4x8xf32>
    %25 = vector.extract_strided_slice %10 {offsets = [0, 24], sizes = [4, 8], strides = [1, 1]} : vector<4x32xf32> to vector<4x8xf32>
    %26 = arith.negf %25 : vector<4x8xf32>
    %27 = math.exp %26 : vector<4x8xf32>
    %cst_11 = arith.constant 1.000000e+00 : f32
    %28 = vector.broadcast %cst_11 : f32 to vector<4x8xf32>
    %29 = arith.addf %28, %27 : vector<4x8xf32>
    %30 = arith.divf %28, %29 : vector<4x8xf32>
    %31 = arith.mulf %22, %5 : vector<4x8xf32>
    %32 = arith.mulf %16, %24 : vector<4x8xf32>
    %33 = arith.addf %31, %32 : vector<4x8xf32>
    %34 = math.tanh %33 : vector<4x8xf32>
    %35 = arith.mulf %30, %34 : vector<4x8xf32>
    %c1_i32 = arith.constant 1 : i32
    %36 = arith.index_cast %c1_i32 : i32 to index
    %c0_12 = arith.constant 0 : index
    %c0_13 = arith.constant 0 : index
    %37 = vector.load %arg2[%36, %c0_12, %c0_13] : memref<8x4x32xf32, #tpu.memory_space<vmem>>, vector<1x4x32xf32>
    %38 = vector.shape_cast %37 : vector<1x4x32xf32> to vector<4x32xf32>
    %cst_14 = arith.constant dense<0.000000e+00> : vector<4x32xf32>
    %39 = tpu.matmul %35, %3, %cst_14 {dimension_numbers = #tpu.dot_dimension_numbers<[1], [0], [0], [1], [0, 0, 1, 1], [], []>} : vector<4x8xf32>, vector<8x32xf32>, vector<4x32xf32> -> vector<4x32xf32>
    %40 = arith.addf %38, %39 : vector<4x32xf32>
    %41 = vector.extract_strided_slice %40 {offsets = [0, 0], sizes = [4, 8], strides = [1, 1]} : vector<4x32xf32> to vector<4x8xf32>
    %42 = arith.negf %41 : vector<4x8xf32>
    %43 = math.exp %42 : vector<4x8xf32>
    %cst_15 = arith.constant 1.000000e+00 : f32
    %44 = vector.broadcast %cst_15 : f32 to vector<4x8xf32>
    %45 = arith.addf %44, %43 : vector<4x8xf32>
    %46 = arith.divf %44, %45 : vector<4x8xf32>
    %47 = vector.extract_strided_slice %40 {offsets = [0, 8], sizes = [4, 8], strides = [1, 1]} : vector<4x32xf32> to vector<4x8xf32>
    %48 = arith.negf %47 : vector<4x8xf32>
    %49 = math.exp %48 : vector<4x8xf32>
    %cst_16 = arith.constant 1.000000e+00 : f32
    %50 = vector.broadcast %cst_16 : f32 to vector<4x8xf32>
    %51 = arith.addf %50, %49 : vector<4x8xf32>
    %52 = arith.divf %50, %51 : vector<4x8xf32>
    %53 = vector.extract_strided_slice %40 {offsets = [0, 16], sizes = [4, 8], strides = [1, 1]} : vector<4x32xf32> to vector<4x8xf32>
    %54 = math.tanh %53 : vector<4x8xf32>
    %55 = vector.extract_strided_slice %40 {offsets = [0, 24], sizes = [4, 8], strides = [1, 1]} : vector<4x32xf32> to vector<4x8xf32>
    %56 = arith.negf %55 : vector<4x8xf32>
    %57 = math.exp %56 : vector<4x8xf32>
    %cst_17 = arith.constant 1.000000e+00 : f32
    %58 = vector.broadcast %cst_17 : f32 to vector<4x8xf32>
    %59 = arith.addf %58, %57 : vector<4x8xf32>
    %60 = arith.divf %58, %59 : vector<4x8xf32>
    %61 = arith.mulf %52, %33 : vector<4x8xf32>
    %62 = arith.mulf %46, %54 : vector<4x8xf32>
    %63 = arith.addf %61, %62 : vector<4x8xf32>
    %64 = math.tanh %63 : vector<4x8xf32>
    %65 = arith.mulf %60, %64 : vector<4x8xf32>
    %c2_i32 = arith.constant 2 : i32
    %66 = arith.index_cast %c2_i32 : i32 to index
    %c0_18 = arith.constant 0 : index
    %c0_19 = arith.constant 0 : index
    %67 = vector.load %arg2[%66, %c0_18, %c0_19] : memref<8x4x32xf32, #tpu.memory_space<vmem>>, vector<1x4x32xf32>
    %68 = vector.shape_cast %67 : vector<1x4x32xf32> to vector<4x32xf32>
    %cst_20 = arith.constant dense<0.000000e+00> : vector<4x32xf32>
    %69 = tpu.matmul %65, %3, %cst_20 {dimension_numbers = #tpu.dot_dimension_numbers<[1], [0], [0], [1], [0, 0, 1, 1], [], []>} : vector<4x8xf32>, vector<8x32xf32>, vector<4x32xf32> -> vector<4x32xf32>
    %70 = arith.addf %68, %69 : vector<4x32xf32>
    %71 = vector.extract_strided_slice %70 {offsets = [0, 0], sizes = [4, 8], strides = [1, 1]} : vector<4x32xf32> to vector<4x8xf32>
    %72 = arith.negf %71 : vector<4x8xf32>
    %73 = math.exp %72 : vector<4x8xf32>
    %cst_21 = arith.constant 1.000000e+00 : f32
    %74 = vector.broadcast %cst_21 : f32 to vector<4x8xf32>
    %75 = arith.addf %74, %73 : vector<4x8xf32>
    %76 = arith.divf %74, %75 : vector<4x8xf32>
    %77 = vector.extract_strided_slice %70 {offsets = [0, 8], sizes = [4, 8], strides = [1, 1]} : vector<4x32xf32> to vector<4x8xf32>
    %78 = arith.negf %77 : vector<4x8xf32>
    %79 = math.exp %78 : vector<4x8xf32>
    %cst_22 = arith.constant 1.000000e+00 : f32
    %80 = vector.broadcast %cst_22 : f32 to vector<4x8xf32>
    %81 = arith.addf %80, %79 : vector<4x8xf32>
    %82 = arith.divf %80, %81 : vector<4x8xf32>
    %83 = vector.extract_strided_slice %70 {offsets = [0, 16], sizes = [4, 8], strides = [1, 1]} : vector<4x32xf32> to vector<4x8xf32>
    %84 = math.tanh %83 : vector<4x8xf32>
    %85 = vector.extract_strided_slice %70 {offsets = [0, 24], sizes = [4, 8], strides = [1, 1]} : vector<4x32xf32> to vector<4x8xf32>
    %86 = arith.negf %85 : vector<4x8xf32>
    %87 = math.exp %86 : vector<4x8xf32>
    %cst_23 = arith.constant 1.000000e+00 : f32
    %88 = vector.broadcast %cst_23 : f32 to vector<4x8xf32>
    %89 = arith.addf %88, %87 : vector<4x8xf32>
    %90 = arith.divf %88, %89 : vector<4x8xf32>
    %91 = arith.mulf %82, %63 : vector<4x8xf32>
    %92 = arith.mulf %76, %84 : vector<4x8xf32>
    %93 = arith.addf %91, %92 : vector<4x8xf32>
    %94 = math.tanh %93 : vector<4x8xf32>
    %95 = arith.mulf %90, %94 : vector<4x8xf32>
    %c3_i32 = arith.constant 3 : i32
    %96 = arith.index_cast %c3_i32 : i32 to index
    %c0_24 = arith.constant 0 : index
    %c0_25 = arith.constant 0 : index
    %97 = vector.load %arg2[%96, %c0_24, %c0_25] : memref<8x4x32xf32, #tpu.memory_space<vmem>>, vector<1x4x32xf32>
    %98 = vector.shape_cast %97 : vector<1x4x32xf32> to vector<4x32xf32>
    %cst_26 = arith.constant dense<0.000000e+00> : vector<4x32xf32>
    %99 = tpu.matmul %95, %3, %cst_26 {dimension_numbers = #tpu.dot_dimension_numbers<[1], [0], [0], [1], [0, 0, 1, 1], [], []>} : vector<4x8xf32>, vector<8x32xf32>, vector<4x32xf32> -> vector<4x32xf32>
    %100 = arith.addf %98, %99 : vector<4x32xf32>
    %101 = vector.extract_strided_slice %100 {offsets = [0, 0], sizes = [4, 8], strides = [1, 1]} : vector<4x32xf32> to vector<4x8xf32>
    %102 = arith.negf %101 : vector<4x8xf32>
    %103 = math.exp %102 : vector<4x8xf32>
    %cst_27 = arith.constant 1.000000e+00 : f32
    %104 = vector.broadcast %cst_27 : f32 to vector<4x8xf32>
    %105 = arith.addf %104, %103 : vector<4x8xf32>
    %106 = arith.divf %104, %105 : vector<4x8xf32>
    %107 = vector.extract_strided_slice %100 {offsets = [0, 8], sizes = [4, 8], strides = [1, 1]} : vector<4x32xf32> to vector<4x8xf32>
    %108 = arith.negf %107 : vector<4x8xf32>
    %109 = math.exp %108 : vector<4x8xf32>
    %cst_28 = arith.constant 1.000000e+00 : f32
    %110 = vector.broadcast %cst_28 : f32 to vector<4x8xf32>
    %111 = arith.addf %110, %109 : vector<4x8xf32>
    %112 = arith.divf %110, %111 : vector<4x8xf32>
    %113 = vector.extract_strided_slice %100 {offsets = [0, 16], sizes = [4, 8], strides = [1, 1]} : vector<4x32xf32> to vector<4x8xf32>
    %114 = math.tanh %113 : vector<4x8xf32>
    %115 = vector.extract_strided_slice %100 {offsets = [0, 24], sizes = [4, 8], strides = [1, 1]} : vector<4x32xf32> to vector<4x8xf32>
    %116 = arith.negf %115 : vector<4x8xf32>
    %117 = math.exp %116 : vector<4x8xf32>
    %cst_29 = arith.constant 1.000000e+00 : f32
    %118 = vector.broadcast %cst_29 : f32 to vector<4x8xf32>
    %119 = arith.addf %118, %117 : vector<4x8xf32>
    %120 = arith.divf %118, %119 : vector<4x8xf32>
    %121 = arith.mulf %112, %93 : vector<4x8xf32>
    %122 = arith.mulf %106, %114 : vector<4x8xf32>
    %123 = arith.addf %121, %122 : vector<4x8xf32>
    %124 = math.tanh %123 : vector<4x8xf32>
    %125 = arith.mulf %120, %124 : vector<4x8xf32>
    %c4_i32 = arith.constant 4 : i32
    %126 = arith.index_cast %c4_i32 : i32 to index
    %c0_30 = arith.constant 0 : index
    %c0_31 = arith.constant 0 : index
    %127 = vector.load %arg2[%126, %c0_30, %c0_31] : memref<8x4x32xf32, #tpu.memory_space<vmem>>, vector<1x4x32xf32>
    %128 = vector.shape_cast %127 : vector<1x4x32xf32> to vector<4x32xf32>
    %cst_32 = arith.constant dense<0.000000e+00> : vector<4x32xf32>
    %129 = tpu.matmul %125, %3, %cst_32 {dimension_numbers = #tpu.dot_dimension_numbers<[1], [0], [0], [1], [0, 0, 1, 1], [], []>} : vector<4x8xf32>, vector<8x32xf32>, vector<4x32xf32> -> vector<4x32xf32>
    %130 = arith.addf %128, %129 : vector<4x32xf32>
    %131 = vector.extract_strided_slice %130 {offsets = [0, 0], sizes = [4, 8], strides = [1, 1]} : vector<4x32xf32> to vector<4x8xf32>
    %132 = arith.negf %131 : vector<4x8xf32>
    %133 = math.exp %132 : vector<4x8xf32>
    %cst_33 = arith.constant 1.000000e+00 : f32
    %134 = vector.broadcast %cst_33 : f32 to vector<4x8xf32>
    %135 = arith.addf %134, %133 : vector<4x8xf32>
    %136 = arith.divf %134, %135 : vector<4x8xf32>
    %137 = vector.extract_strided_slice %130 {offsets = [0, 8], sizes = [4, 8], strides = [1, 1]} : vector<4x32xf32> to vector<4x8xf32>
    %138 = arith.negf %137 : vector<4x8xf32>
    %139 = math.exp %138 : vector<4x8xf32>
    %cst_34 = arith.constant 1.000000e+00 : f32
    %140 = vector.broadcast %cst_34 : f32 to vector<4x8xf32>
    %141 = arith.addf %140, %139 : vector<4x8xf32>
    %142 = arith.divf %140, %141 : vector<4x8xf32>
    %143 = vector.extract_strided_slice %130 {offsets = [0, 16], sizes = [4, 8], strides = [1, 1]} : vector<4x32xf32> to vector<4x8xf32>
    %144 = math.tanh %143 : vector<4x8xf32>
    %145 = vector.extract_strided_slice %130 {offsets = [0, 24], sizes = [4, 8], strides = [1, 1]} : vector<4x32xf32> to vector<4x8xf32>
    %146 = arith.negf %145 : vector<4x8xf32>
    %147 = math.exp %146 : vector<4x8xf32>
    %cst_35 = arith.constant 1.000000e+00 : f32
    %148 = vector.broadcast %cst_35 : f32 to vector<4x8xf32>
    %149 = arith.addf %148, %147 : vector<4x8xf32>
    %150 = arith.divf %148, %149 : vector<4x8xf32>
    %151 = arith.mulf %142, %123 : vector<4x8xf32>
    %152 = arith.mulf %136, %144 : vector<4x8xf32>
    %153 = arith.addf %151, %152 : vector<4x8xf32>
    %154 = math.tanh %153 : vector<4x8xf32>
    %155 = arith.mulf %150, %154 : vector<4x8xf32>
    %c5_i32 = arith.constant 5 : i32
    %156 = arith.index_cast %c5_i32 : i32 to index
    %c0_36 = arith.constant 0 : index
    %c0_37 = arith.constant 0 : index
    %157 = vector.load %arg2[%156, %c0_36, %c0_37] : memref<8x4x32xf32, #tpu.memory_space<vmem>>, vector<1x4x32xf32>
    %158 = vector.shape_cast %157 : vector<1x4x32xf32> to vector<4x32xf32>
    %cst_38 = arith.constant dense<0.000000e+00> : vector<4x32xf32>
    %159 = tpu.matmul %155, %3, %cst_38 {dimension_numbers = #tpu.dot_dimension_numbers<[1], [0], [0], [1], [0, 0, 1, 1], [], []>} : vector<4x8xf32>, vector<8x32xf32>, vector<4x32xf32> -> vector<4x32xf32>
    %160 = arith.addf %158, %159 : vector<4x32xf32>
    %161 = vector.extract_strided_slice %160 {offsets = [0, 0], sizes = [4, 8], strides = [1, 1]} : vector<4x32xf32> to vector<4x8xf32>
    %162 = arith.negf %161 : vector<4x8xf32>
    %163 = math.exp %162 : vector<4x8xf32>
    %cst_39 = arith.constant 1.000000e+00 : f32
    %164 = vector.broadcast %cst_39 : f32 to vector<4x8xf32>
    %165 = arith.addf %164, %163 : vector<4x8xf32>
    %166 = arith.divf %164, %165 : vector<4x8xf32>
    %167 = vector.extract_strided_slice %160 {offsets = [0, 8], sizes = [4, 8], strides = [1, 1]} : vector<4x32xf32> to vector<4x8xf32>
    %168 = arith.negf %167 : vector<4x8xf32>
    %169 = math.exp %168 : vector<4x8xf32>
    %cst_40 = arith.constant 1.000000e+00 : f32
    %170 = vector.broadcast %cst_40 : f32 to vector<4x8xf32>
    %171 = arith.addf %170, %169 : vector<4x8xf32>
    %172 = arith.divf %170, %171 : vector<4x8xf32>
    %173 = vector.extract_strided_slice %160 {offsets = [0, 16], sizes = [4, 8], strides = [1, 1]} : vector<4x32xf32> to vector<4x8xf32>
    %174 = math.tanh %173 : vector<4x8xf32>
    %175 = vector.extract_strided_slice %160 {offsets = [0, 24], sizes = [4, 8], strides = [1, 1]} : vector<4x32xf32> to vector<4x8xf32>
    %176 = arith.negf %175 : vector<4x8xf32>
    %177 = math.exp %176 : vector<4x8xf32>
    %cst_41 = arith.constant 1.000000e+00 : f32
    %178 = vector.broadcast %cst_41 : f32 to vector<4x8xf32>
    %179 = arith.addf %178, %177 : vector<4x8xf32>
    %180 = arith.divf %178, %179 : vector<4x8xf32>
    %181 = arith.mulf %172, %153 : vector<4x8xf32>
    %182 = arith.mulf %166, %174 : vector<4x8xf32>
    %183 = arith.addf %181, %182 : vector<4x8xf32>
    %184 = math.tanh %183 : vector<4x8xf32>
    %185 = arith.mulf %180, %184 : vector<4x8xf32>
    %c6_i32 = arith.constant 6 : i32
    %186 = arith.index_cast %c6_i32 : i32 to index
    %c0_42 = arith.constant 0 : index
    %c0_43 = arith.constant 0 : index
    %187 = vector.load %arg2[%186, %c0_42, %c0_43] : memref<8x4x32xf32, #tpu.memory_space<vmem>>, vector<1x4x32xf32>
    %188 = vector.shape_cast %187 : vector<1x4x32xf32> to vector<4x32xf32>
    %cst_44 = arith.constant dense<0.000000e+00> : vector<4x32xf32>
    %189 = tpu.matmul %185, %3, %cst_44 {dimension_numbers = #tpu.dot_dimension_numbers<[1], [0], [0], [1], [0, 0, 1, 1], [], []>} : vector<4x8xf32>, vector<8x32xf32>, vector<4x32xf32> -> vector<4x32xf32>
    %190 = arith.addf %188, %189 : vector<4x32xf32>
    %191 = vector.extract_strided_slice %190 {offsets = [0, 0], sizes = [4, 8], strides = [1, 1]} : vector<4x32xf32> to vector<4x8xf32>
    %192 = arith.negf %191 : vector<4x8xf32>
    %193 = math.exp %192 : vector<4x8xf32>
    %cst_45 = arith.constant 1.000000e+00 : f32
    %194 = vector.broadcast %cst_45 : f32 to vector<4x8xf32>
    %195 = arith.addf %194, %193 : vector<4x8xf32>
    %196 = arith.divf %194, %195 : vector<4x8xf32>
    %197 = vector.extract_strided_slice %190 {offsets = [0, 8], sizes = [4, 8], strides = [1, 1]} : vector<4x32xf32> to vector<4x8xf32>
    %198 = arith.negf %197 : vector<4x8xf32>
    %199 = math.exp %198 : vector<4x8xf32>
    %cst_46 = arith.constant 1.000000e+00 : f32
    %200 = vector.broadcast %cst_46 : f32 to vector<4x8xf32>
    %201 = arith.addf %200, %199 : vector<4x8xf32>
    %202 = arith.divf %200, %201 : vector<4x8xf32>
    %203 = vector.extract_strided_slice %190 {offsets = [0, 16], sizes = [4, 8], strides = [1, 1]} : vector<4x32xf32> to vector<4x8xf32>
    %204 = math.tanh %203 : vector<4x8xf32>
    %205 = vector.extract_strided_slice %190 {offsets = [0, 24], sizes = [4, 8], strides = [1, 1]} : vector<4x32xf32> to vector<4x8xf32>
    %206 = arith.negf %205 : vector<4x8xf32>
    %207 = math.exp %206 : vector<4x8xf32>
    %cst_47 = arith.constant 1.000000e+00 : f32
    %208 = vector.broadcast %cst_47 : f32 to vector<4x8xf32>
    %209 = arith.addf %208, %207 : vector<4x8xf32>
    %210 = arith.divf %208, %209 : vector<4x8xf32>
    %211 = arith.mulf %202, %183 : vector<4x8xf32>
    %212 = arith.mulf %196, %204 : vector<4x8xf32>
    %213 = arith.addf %211, %212 : vector<4x8xf32>
    %214 = math.tanh %213 : vector<4x8xf32>
    %215 = arith.mulf %210, %214 : vector<4x8xf32>
    %c7_i32 = arith.constant 7 : i32
    %216 = arith.index_cast %c7_i32 : i32 to index
    %c0_48 = arith.constant 0 : index
    %c0_49 = arith.constant 0 : index
    %217 = vector.load %arg2[%216, %c0_48, %c0_49] : memref<8x4x32xf32, #tpu.memory_space<vmem>>, vector<1x4x32xf32>
    %218 = vector.shape_cast %217 : vector<1x4x32xf32> to vector<4x32xf32>
    %cst_50 = arith.constant dense<0.000000e+00> : vector<4x32xf32>
    %219 = tpu.matmul %215, %3, %cst_50 {dimension_numbers = #tpu.dot_dimension_numbers<[1], [0], [0], [1], [0, 0, 1, 1], [], []>} : vector<4x8xf32>, vector<8x32xf32>, vector<4x32xf32> -> vector<4x32xf32>
    %220 = arith.addf %218, %219 : vector<4x32xf32>
    %221 = vector.extract_strided_slice %220 {offsets = [0, 0], sizes = [4, 8], strides = [1, 1]} : vector<4x32xf32> to vector<4x8xf32>
    %222 = arith.negf %221 : vector<4x8xf32>
    %223 = math.exp %222 : vector<4x8xf32>
    %cst_51 = arith.constant 1.000000e+00 : f32
    %224 = vector.broadcast %cst_51 : f32 to vector<4x8xf32>
    %225 = arith.addf %224, %223 : vector<4x8xf32>
    %226 = arith.divf %224, %225 : vector<4x8xf32>
    %227 = vector.extract_strided_slice %220 {offsets = [0, 8], sizes = [4, 8], strides = [1, 1]} : vector<4x32xf32> to vector<4x8xf32>
    %228 = arith.negf %227 : vector<4x8xf32>
    %229 = math.exp %228 : vector<4x8xf32>
    %cst_52 = arith.constant 1.000000e+00 : f32
    %230 = vector.broadcast %cst_52 : f32 to vector<4x8xf32>
    %231 = arith.addf %230, %229 : vector<4x8xf32>
    %232 = arith.divf %230, %231 : vector<4x8xf32>
    %233 = vector.extract_strided_slice %220 {offsets = [0, 16], sizes = [4, 8], strides = [1, 1]} : vector<4x32xf32> to vector<4x8xf32>
    %234 = math.tanh %233 : vector<4x8xf32>
    %235 = vector.extract_strided_slice %220 {offsets = [0, 24], sizes = [4, 8], strides = [1, 1]} : vector<4x32xf32> to vector<4x8xf32>
    %236 = arith.negf %235 : vector<4x8xf32>
    %237 = math.exp %236 : vector<4x8xf32>
    %cst_53 = arith.constant 1.000000e+00 : f32
    %238 = vector.broadcast %cst_53 : f32 to vector<4x8xf32>
    %239 = arith.addf %238, %237 : vector<4x8xf32>
    %240 = arith.divf %238, %239 : vector<4x8xf32>
    %241 = arith.mulf %232, %213 : vector<4x8xf32>
    %242 = arith.mulf %226, %234 : vector<4x8xf32>
    %243 = arith.addf %241, %242 : vector<4x8xf32>
    %244 = math.tanh %243 : vector<4x8xf32>
    %245 = arith.mulf %240, %244 : vector<4x8xf32>
    %c8_i32 = arith.constant 8 : i32
    %c0_54 = arith.constant 0 : index
    %c0_55 = arith.constant 0 : index
    %246 = vector.load %arg5[%c0_54, %c0_55] : memref<4x8xf32, #tpu.memory_space<vmem>>, vector<4x8xf32>
    tpu.vector_store %arg5[%c0_54, %c0_55], %245 {strides = array<i32>} : memref<4x8xf32, #tpu.memory_space<vmem>>, vector<4x8xf32>,
    %c0_56 = arith.constant 0 : index
    %c0_57 = arith.constant 0 : index
    %247 = vector.load %arg6[%c0_56, %c0_57] : memref<4x8xf32, #tpu.memory_space<vmem>>, vector<4x8xf32>
    tpu.vector_store %arg6[%c0_56, %c0_57], %243 {strides = array<i32>} : memref<4x8xf32, #tpu.memory_space<vmem>>, vector<4x8xf32>,
    %c0_i32_58 = arith.constant 0 : i32
    %248 = arith.cmpi eq, %arg1, %c0_i32_58 : i32
    %249 = arith.extui %248 : i1 to i32
    %c0_i32_59 = arith.constant 0 : i32
    %250 = arith.cmpi ne, %249, %c0_i32_59 : i32
    scf.if %250 {
      %c0_60 = arith.constant 0 : index
      %c0_61 = arith.constant 0 : index
      %251 = vector.load %arg4[%c0_60, %c0_61] : memref<4x8xf32, #tpu.memory_space<vmem>>, vector<4x8xf32>
      tpu.vector_store %arg4[%c0_60, %c0_61], %245 {strides = array<i32>} : memref<4x8xf32, #tpu.memory_space<vmem>>, vector<4x8xf32>,
    } else {
    }
    return
  }
  func.func @transform_0(%arg0: i32, %arg1: i32) -> (i32, i32, i32) {
    %c0_i32 = arith.constant 0 : i32
    %c0_i32_0 = arith.constant 0 : i32
    return %arg1, %arg0, %c0_i32 : i32, i32, i32
  }
  func.func @transform_1(%arg0: i32, %arg1: i32) -> (i32, i32) {
    %c0_i32 = arith.constant 0 : i32
    %c0_i32_0 = arith.constant 0 : i32
    %c0_i32_1 = arith.constant 0 : i32
    return %c0_i32, %c0_i32_0 : i32, i32
  }
  func.func @transform_2(%arg0: i32, %arg1: i32) -> (i32, i32) {
    %c0_i32 = arith.constant 0 : i32
    %c0_i32_0 = arith.constant 0 : i32
    return %arg0, %c0_i32 : i32, i32
  }
}

</mosaic_0001>

<llo_original>
// kernel: tpu_custom_call.1
$region0: #{tpu_custom_call.1}
  #allocation0 [shape = 'u32[]', space=smem, size = 0x4, offset = 0x4, fixed_abs, tag = 'smem constant byte address 0x4 - core index']
  #allocation1 [shape = 'u32[72,128]{1,0:T(1,128)}', space=vmem, size = 0x9000, scoped, tag = 'internal scratch']
  #allocation2 [shape = 'f32[4,8]{1,0:T(4,128)}', space=vmem, size = 0x800, scoped, tag = 'scratch operand']
  #allocation3 [shape = 'f32[4,8]{1,0:T(4,128)}', space=vmem, size = 0x800, scoped, tag = 'scratch operand']
  %s0 = inlined_call_operand.hbm [shape: f32[8,4,32], index: 0, kind: input, shape index: {}]
  %s1 = inlined_call_operand.hbm [shape: f32[8,32], index: 1, kind: input, shape index: {}]
  %s2 = inlined_call_operand.hbm [shape: f32[4,8], index: 2, kind: output, shape index: {}]
  %s3 = sld [smem:[#allocation0]]
  $region34: #{tpu_custom_call.1} parent=0
    _
  %s5 = ssub.s32 1, %s3
  %s6 = scalar_select 0, %s5, %s3
  $region1: #{tpu_custom_call.1} parent=0
    #allocation4 [shape = 'u8[16384]{0}', space=vmem, size = 0x4000, scoped, tag = 'input window, operand 0, single buffered']
    #allocation5 [shape = 's32[1]{0}', space=sflag, size = 0x4, scoped, tag = 'scoped memory for tpu_custom_call.1']
    #allocation6 [shape = 's32[1]{0}', space=sflag, size = 0x4, scoped, tag = 'scoped memory for tpu_custom_call.1']
    #allocation7 [shape = 'u8[4096]{0}', space=vmem, size = 0x1000, scoped, tag = 'input window, operand 1, single buffered']
    #allocation8 [shape = 's32[1]{0}', space=sflag, size = 0x4, scoped, tag = 'scoped memory for tpu_custom_call.1']
    #allocation9 [shape = 'u8[2048]{0}', space=vmem, size = 0x800, scoped, tag = 'output window, operand 0, single buffered']
    %7 = vsyncpa [#allocation5], 0
    %8 = vsyncpa [#allocation8], 0
    %9 = vsyncpa [#allocation6], 0
    // Predicated region
    $region2: #{tpu_custom_call.1} parent=1 // pred_check
      _
    $region3: #{tpu_custom_call.1} parent=1 // pred_check_branch
      %11 = sbr.rel (0) target = $region5
    $region4: #{tpu_custom_call.1} parent=1 // pred_region
      %13 = vsyncadd [#allocation5], 0
      %s14 = sshll.u32 %s0, 4
      %s15 = int_to_ptr.hbm [resolvable:$true] %s14
      %s16 = sshll.u32 [#allocation4], 4
      %s17 = int_to_ptr.vmem [resolvable:$true] %s16
      %22 = dma.hbm_to_vmem [thread:$0]  %s15, 512, %s17, [#allocation5], 64, 64, 4
    $region5: #{tpu_custom_call.1} parent=1 // pred_fallthru
      _
    // Predicated region
    $region6: #{tpu_custom_call.1} parent=1 // pred_check
      _
    $region7: #{tpu_custom_call.1} parent=1 // pred_check_branch
      %24 = sbr.rel (0) target = $region9
    $region8: #{tpu_custom_call.1} parent=1 // pred_region
      %26 = vsyncadd [#allocation8], 0
      %s28 = sshll.u32 %s1, 4
      %s29 = int_to_ptr.hbm [resolvable:$true] %s28
      %s30 = sshll.u32 [#allocation7], 4
      %s31 = int_to_ptr.vmem [resolvable:$true] %s30
      %33 = dma.hbm_to_vmem [thread:$0]  %s29, 128, %s31, [#allocation8]
    $region9: #{tpu_custom_call.1} parent=1 // pred_fallthru
      _
    // Predicated region
    $region10: #{tpu_custom_call.1} parent=1 // pred_check
      _
    $region11: #{tpu_custom_call.1} parent=1 // pred_check_branch
      %35 = sbr.rel (0) target = $region13
    $region12: #{tpu_custom_call.1} parent=1 // pred_region
      %37 = dma.done [#allocation5], 512
    $region13: #{tpu_custom_call.1} parent=1 // pred_fallthru
      _
    // Predicated region
    $region14: #{tpu_custom_call.1} parent=1 // pred_check
      _
    $region15: #{tpu_custom_call.1} parent=1 // pred_check_branch
      %39 = sbr.rel (0) target = $region17
    $region16: #{tpu_custom_call.1} parent=1 // pred_region
      %41 = dma.done [#allocation8], 128
    $region17: #{tpu_custom_call.1} parent=1 // pred_fallthru
      _
    %p42 = scmp.eq.s32.totalorder 0, 0
    // Predicated region
    $region18: #{tpu_custom_call.1} parent=1 // pred_check
      %p43 = pneg %p42
    $region19: #{tpu_custom_call.1} parent=1 // pred_check_branch
      %45 = sbr.rel (%p43) target = $region21
    $region20: #{tpu_custom_call.1} parent=1 // pred_region
      %vm46 = vcmask 60416
      %47 = vst.msk [vmem:[#allocation2] sm:$0xf] %vm46, 0.0
      %48 = vst.msk [vmem:[#allocation3] sm:$0xf] %vm46, 0.0
    $region21: #{tpu_custom_call.1} parent=1 // pred_fallthru
      _
    %v49 = vld [vmem:[#allocation7] sm:$0xff]
    %v50 = vld [vmem:[#allocation2] sm:$0xf]
    %v51 = vld [vmem:[#allocation3] sm:$0xf]
    %v52 = vld [vmem:[#allocation4] sm:$0xf]
    %vm53 = vcmask 64512
    %v55 = vsel %vm53, %v50, 0
    %57 = vmatpush.msra.mxu0 0.0
    %58 = vmatpush.msra.mxu0 0.0
    %59 = vmatpush.msra.mxu0 0.0
    %60 = vmatpush.msra.mxu0 0.0
    %61 = vmatpush.msra.mxu0 0.0
    %62 = vmatpush.msra.mxu0 0.0
    %63 = vmatpush.msra.mxu0 0.0
    %64 = vmatpush.msra.mxu0 0.0
    %65 = vmatpush.msra.mxu0 0.0
    %66 = vmatpush.msra.mxu0 0.0
    %67 = vmatpush.msra.mxu0 0.0
    %68 = vmatpush.msra.mxu0 0.0
    %69 = vmatpush.msra.mxu0 0.0
    %70 = vmatpush.msra.mxu0 0.0
    %71 = vmatpush.msra.mxu0 0.0
    %72 = vmatpush.msra.mxu0 %v49
    %73 = vmatmul.f32.gmra.mxu0 %v55
    %v74 = vpop.f32.mrf.mxu0
    %v75 = vadd.f32 0.0, %v74
    %76 = vdwg.mxu0
    %v77 = vadd.f32 %v52, %v75
    %v78 = vxor.u32 %v77, 2147483648
    %v79 = vmul.f32 %v78, 1.442695
    %v80 = vpow.pop %v79
    %v81 = vadd.f32 %v80, 1.0
    %v82 = vrcp.pop %v81
    %v83 = vmul.f32 %v81, %v82
    %v84 = vsub.f32 1.0, %v83
    %v85 = vmul.f32 %v82, %v84
    %v86 = vadd.f32 %v82, %v85
    %vm87 = vweird.f32 %v81
    %vm88 = vweird.f32 %v82
    %vm89 = vmor %vm87, %vm88
    %v90 = vsel %vm89, %v82, %v86
    %v91 = vand.u32 2147483647, %v81
    %vm92 = vcmp.eq.f32.partialorder %v91, 8.507059e+37
    %v93 = vand.u32 %v81, 2147483648
    %v94 = vor.u32 1.1754944e-38, %v93
    %v95 = vsel %vm92, %v94, %v90
    %v96 = vmul.f32 1.0, %v95
    %v97 = vtanh.pop %v77
    %99 = vrot.lane.b32.xlu0 %v51, 8
    %v100 = vpop.permute.xlu0 %99
    %v102 = vmul.f32 %v96, %v100
    %104 = vrot.lane.b32.xlu0 %v97, 112
    %v105 = vpop.permute.xlu0 %104
    %v107 = vmul.f32 %v96, %v105
    %109 = vrot.lane.b32.xlu0 %v107, 8
    %v110 = vpop.permute.xlu0 %109
    %v112 = vadd.f32 %v102, %v110
    %v113 = vtanh.pop %v112
    %115 = vrot.lane.b32.xlu0 %v113, 16
    %v116 = vpop.permute.xlu0 %115
    %v118 = vmul.f32 %v96, %v116
    %s119 = scalar_lea.vmem [#allocation4], 4
    %v120 = vld [vmem:[%s119] sm:$0xf]
    %122 = vrot.lane.b32.xlu0 %v118, 104
    %v123 = vpop.permute.xlu0 %122
    %v124 = vsel %vm53, %v123, 0
    %126 = vmatpush.msra.mxu0 0.0
    %127 = vmatpush.msra.mxu0 0.0
    %128 = vmatpush.msra.mxu0 0.0
    %129 = vmatpush.msra.mxu0 0.0
    %130 = vmatpush.msra.mxu0 0.0
    %131 = vmatpush.msra.mxu0 0.0
    %132 = vmatpush.msra.mxu0 0.0
    %133 = vmatpush.msra.mxu0 0.0
    %134 = vmatpush.msra.mxu0 0.0
    %135 = vmatpush.msra.mxu0 0.0
    %136 = vmatpush.msra.mxu0 0.0
    %137 = vmatpush.msra.mxu0 0.0
    %138 = vmatpush.msra.mxu0 0.0
    %139 = vmatpush.msra.mxu0 0.0
    %140 = vmatpush.msra.mxu0 0.0
    %141 = vmatpush.msra.mxu0 %v49
    %142 = vmatmul.f32.gmra.mxu0 %v124
    %v143 = vpop.f32.mrf.mxu0
    %v144 = vadd.f32 0.0, %v143
    %145 = vdwg.mxu0
    %v146 = vadd.f32 %v120, %v144
    %v147 = vxor.u32 %v146, 2147483648
    %v148 = vmul.f32 %v147, 1.442695
    %v149 = vpow.pop %v148
    %v150 = vadd.f32 %v149, 1.0
    %v151 = vrcp.pop %v150
    %v152 = vmul.f32 %v150, %v151
    %v153 = vsub.f32 1.0, %v152
    %v154 = vmul.f32 %v151, %v153
    %v155 = vadd.f32 %v151, %v154
    %vm156 = vweird.f32 %v150
    %vm157 = vweird.f32 %v151
    %vm158 = vmor %vm156, %vm157
    %v159 = vsel %vm158, %v151, %v155
    %v160 = vand.u32 2147483647, %v150
    %vm161 = vcmp.eq.f32.partialorder %v160, 8.507059e+37
    %v162 = vand.u32 %v150, 2147483648
    %v163 = vor.u32 1.1754944e-38, %v162
    %v164 = vsel %vm161, %v163, %v159
    %v165 = vmul.f32 1.0, %v164
    %v166 = vtanh.pop %v146
    %v167 = vmul.f32 %v165, %v112
    %169 = vrot.lane.b32.xlu0 %v166, 112
    %v170 = vpop.permute.xlu0 %169
    %v172 = vmul.f32 %v165, %v170
    %174 = vrot.lane.b32.xlu0 %v172, 8
    %v175 = vpop.permute.xlu0 %174
    %v177 = vadd.f32 %v167, %v175
    %v178 = vtanh.pop %v177
    %180 = vrot.lane.b32.xlu0 %v178, 16
    %v181 = vpop.permute.xlu0 %180
    %v183 = vmul.f32 %v165, %v181
    %s184 = scalar_lea.vmem [#allocation4], 8
    %v185 = vld [vmem:[%s184] sm:$0xf]
    %187 = vrot.lane.b32.xlu0 %v183, 104
    %v188 = vpop.permute.xlu0 %187
    %v189 = vsel %vm53, %v188, 0
    %191 = vmatpush.msra.mxu0 0.0
    %192 = vmatpush.msra.mxu0 0.0
    %193 = vmatpush.msra.mxu0 0.0
    %194 = vmatpush.msra.mxu0 0.0
    %195 = vmatpush.msra.mxu0 0.0
    %196 = vmatpush.msra.mxu0 0.0
    %197 = vmatpush.msra.mxu0 0.0
    %198 = vmatpush.msra.mxu0 0.0
    %199 = vmatpush.msra.mxu0 0.0
    %200 = vmatpush.msra.mxu0 0.0
    %201 = vmatpush.msra.mxu0 0.0
    %202 = vmatpush.msra.mxu0 0.0
    %203 = vmatpush.msra.mxu0 0.0
    %204 = vmatpush.msra.mxu0 0.0
    %205 = vmatpush.msra.mxu0 0.0
    %206 = vmatpush.msra.mxu0 %v49
    %207 = vmatmul.f32.gmra.mxu0 %v189
    %v208 = vpop.f32.mrf.mxu0
    %v209 = vadd.f32 0.0, %v208
    %210 = vdwg.mxu0
    %v211 = vadd.f32 %v185, %v209
    %v212 = vxor.u32 %v211, 2147483648
    %v213 = vmul.f32 %v212, 1.442695
    %v214 = vpow.pop %v213
    %v215 = vadd.f32 %v214, 1.0
    %v216 = vrcp.pop %v215
    %v217 = vmul.f32 %v215, %v216
    %v218 = vsub.f32 1.0, %v217
    %v219 = vmul.f32 %v216, %v218
    %v220 = vadd.f32 %v216, %v219
    %vm221 = vweird.f32 %v215
    %vm222 = vweird.f32 %v216
    %vm223 = vmor %vm221, %vm222
    %v224 = vsel %vm223, %v216, %v220
    %v225 = vand.u32 2147483647, %v215
    %vm226 = vcmp.eq.f32.partialorder %v225, 8.507059e+37
    %v227 = vand.u32 %v215, 2147483648
    %v228 = vor.u32 1.1754944e-38, %v227
    %v229 = vsel %vm226, %v228, %v224
    %v230 = vmul.f32 1.0, %v229
    %v231 = vtanh.pop %v211
    %v232 = vmul.f32 %v230, %v177
    %234 = vrot.lane.b32.xlu0 %v231, 112
    %v235 = vpop.permute.xlu0 %234
    %v237 = vmul.f32 %v230, %v235
    %239 = vrot.lane.b32.xlu0 %v237, 8
    %v240 = vpop.permute.xlu0 %239
    %v242 = vadd.f32 %v232, %v240
    %v243 = vtanh.pop %v242
    %245 = vrot.lane.b32.xlu0 %v243, 16
    %v246 = vpop.permute.xlu0 %245
    %v248 = vmul.f32 %v230, %v246
    %s249 = scalar_lea.vmem [#allocation4], 12
    %v250 = vld [vmem:[%s249] sm:$0xf]
    %252 = vrot.lane.b32.xlu0 %v248, 104
    %v253 = vpop.permute.xlu0 %252
    %v254 = vsel %vm53, %v253, 0
    %256 = vmatpush.msra.mxu0 0.0
    %257 = vmatpush.msra.mxu0 0.0
    %258 = vmatpush.msra.mxu0 0.0
    %259 = vmatpush.msra.mxu0 0.0
    %260 = vmatpush.msra.mxu0 0.0
    %261 = vmatpush.msra.mxu0 0.0
    %262 = vmatpush.msra.mxu0 0.0
    %263 = vmatpush.msra.mxu0 0.0
    %264 = vmatpush.msra.mxu0 0.0
    %265 = vmatpush.msra.mxu0 0.0
    %266 = vmatpush.msra.mxu0 0.0
    %267 = vmatpush.msra.mxu0 0.0
    %268 = vmatpush.msra.mxu0 0.0
    %269 = vmatpush.msra.mxu0 0.0
    %270 = vmatpush.msra.mxu0 0.0
    %271 = vmatpush.msra.mxu0 %v49
    %272 = vmatmul.f32.gmra.mxu0 %v254
    %v273 = vpop.f32.mrf.mxu0
    %v274 = vadd.f32 0.0, %v273
    %275 = vdwg.mxu0
    %v276 = vadd.f32 %v250, %v274
    %v277 = vxor.u32 %v276, 2147483648
    %v278 = vmul.f32 %v277, 1.442695
    %v279 = vpow.pop %v278
    %v280 = vadd.f32 %v279, 1.0
    %v281 = vrcp.pop %v280
    %v282 = vmul.f32 %v280, %v281
    %v283 = vsub.f32 1.0, %v282
    %v284 = vmul.f32 %v281, %v283
    %v285 = vadd.f32 %v281, %v284
    %vm286 = vweird.f32 %v280
    %vm287 = vweird.f32 %v281
    %vm288 = vmor %vm286, %vm287
    %v289 = vsel %vm288, %v281, %v285
    %v290 = vand.u32 2147483647, %v280
    %vm291 = vcmp.eq.f32.partialorder %v290, 8.507059e+37
    %v292 = vand.u32 %v280, 2147483648
    %v293 = vor.u32 1.1754944e-38, %v292
    %v294 = vsel %vm291, %v293, %v289
    %v295 = vmul.f32 1.0, %v294
    %v296 = vtanh.pop %v276
    %v297 = vmul.f32 %v295, %v242
    %299 = vrot.lane.b32.xlu0 %v296, 112
    %v300 = vpop.permute.xlu0 %299
    %v302 = vmul.f32 %v295, %v300
    %304 = vrot.lane.b32.xlu0 %v302, 8
    %v305 = vpop.permute.xlu0 %304
    %v307 = vadd.f32 %v297, %v305
    %v308 = vtanh.pop %v307
    %310 = vrot.lane.b32.xlu0 %v308, 16
    %v311 = vpop.permute.xlu0 %310
    %v313 = vmul.f32 %v295, %v311
    %s314 = scalar_lea.vmem [#allocation4], 16
    %v315 = vld [vmem:[%s314] sm:$0xf]
    %317 = vrot.lane.b32.xlu0 %v313, 104
    %v318 = vpop.permute.xlu0 %317
    %v319 = vsel %vm53, %v318, 0
    %321 = vmatpush.msra.mxu0 0.0
    %322 = vmatpush.msra.mxu0 0.0
    %323 = vmatpush.msra.mxu0 0.0
    %324 = vmatpush.msra.mxu0 0.0
    %325 = vmatpush.msra.mxu0 0.0
    %326 = vmatpush.msra.mxu0 0.0
    %327 = vmatpush.msra.mxu0 0.0
    %328 = vmatpush.msra.mxu0 0.0
    %329 = vmatpush.msra.mxu0 0.0
    %330 = vmatpush.msra.mxu0 0.0
    %331 = vmatpush.msra.mxu0 0.0
    %332 = vmatpush.msra.mxu0 0.0
    %333 = vmatpush.msra.mxu0 0.0
    %334 = vmatpush.msra.mxu0 0.0
    %335 = vmatpush.msra.mxu0 0.0
    %336 = vmatpush.msra.mxu0 %v49
    %337 = vmatmul.f32.gmra.mxu0 %v319
    %v338 = vpop.f32.mrf.mxu0
    %v339 = vadd.f32 0.0, %v338
    %340 = vdwg.mxu0
    %v341 = vadd.f32 %v315, %v339
    %v342 = vxor.u32 %v341, 2147483648
    %v343 = vmul.f32 %v342, 1.442695
    %v344 = vpow.pop %v343
    %v345 = vadd.f32 %v344, 1.0
    %v346 = vrcp.pop %v345
    %v347 = vmul.f32 %v345, %v346
    %v348 = vsub.f32 1.0, %v347
    %v349 = vmul.f32 %v346, %v348
    %v350 = vadd.f32 %v346, %v349
    %vm351 = vweird.f32 %v345
    %vm352 = vweird.f32 %v346
    %vm353 = vmor %vm351, %vm352
    %v354 = vsel %vm353, %v346, %v350
    %v355 = vand.u32 2147483647, %v345
    %vm356 = vcmp.eq.f32.partialorder %v355, 8.507059e+37
    %v357 = vand.u32 %v345, 2147483648
    %v358 = vor.u32 1.1754944e-38, %v357
    %v359 = vsel %vm356, %v358, %v354
    %v360 = vmul.f32 1.0, %v359
    %v361 = vtanh.pop %v341
    %v362 = vmul.f32 %v360, %v307
    %364 = vrot.lane.b32.xlu0 %v361, 112
    %v365 = vpop.permute.xlu0 %364
    %v367 = vmul.f32 %v360, %v365
    %369 = vrot.lane.b32.xlu0 %v367, 8
    %v370 = vpop.permute.xlu0 %369
    %v372 = vadd.f32 %v362, %v370
    %v373 = vtanh.pop %v372
    %375 = vrot.lane.b32.xlu0 %v373, 16
    %v376 = vpop.permute.xlu0 %375
    %v378 = vmul.f32 %v360, %v376
    %s379 = scalar_lea.vmem [#allocation4], 20
    %v380 = vld [vmem:[%s379] sm:$0xf]
    %382 = vrot.lane.b32.xlu0 %v378, 104
    %v383 = vpop.permute.xlu0 %382
    %v384 = vsel %vm53, %v383, 0
    %386 = vmatpush.msra.mxu0 0.0
    %387 = vmatpush.msra.mxu0 0.0
    %388 = vmatpush.msra.mxu0 0.0
    %389 = vmatpush.msra.mxu0 0.0
    %390 = vmatpush.msra.mxu0 0.0
    %391 = vmatpush.msra.mxu0 0.0
    %392 = vmatpush.msra.mxu0 0.0
    %393 = vmatpush.msra.mxu0 0.0
    %394 = vmatpush.msra.mxu0 0.0
    %395 = vmatpush.msra.mxu0 0.0
    %396 = vmatpush.msra.mxu0 0.0
    %397 = vmatpush.msra.mxu0 0.0
    %398 = vmatpush.msra.mxu0 0.0
    %399 = vmatpush.msra.mxu0 0.0
    %400 = vmatpush.msra.mxu0 0.0
    %401 = vmatpush.msra.mxu0 %v49
    %402 = vmatmul.f32.gmra.mxu0 %v384
    %v403 = vpop.f32.mrf.mxu0
    %v404 = vadd.f32 0.0, %v403
    %405 = vdwg.mxu0
    %v406 = vadd.f32 %v380, %v404
    %v407 = vxor.u32 %v406, 2147483648
    %v408 = vmul.f32 %v407, 1.442695
    %v409 = vpow.pop %v408
    %v410 = vadd.f32 %v409, 1.0
    %v411 = vrcp.pop %v410
    %v412 = vmul.f32 %v410, %v411
    %v413 = vsub.f32 1.0, %v412
    %v414 = vmul.f32 %v411, %v413
    %v415 = vadd.f32 %v411, %v414
    %vm416 = vweird.f32 %v410
    %vm417 = vweird.f32 %v411
    %vm418 = vmor %vm416, %vm417
    %v419 = vsel %vm418, %v411, %v415
    %v420 = vand.u32 2147483647, %v410
    %vm421 = vcmp.eq.f32.partialorder %v420, 8.507059e+37
    %v422 = vand.u32 %v410, 2147483648
    %v423 = vor.u32 1.1754944e-38, %v422
    %v424 = vsel %vm421, %v423, %v419
    %v425 = vmul.f32 1.0, %v424
    %v426 = vtanh.pop %v406
    %v427 = vmul.f32 %v425, %v372
    %429 = vrot.lane.b32.xlu0 %v426, 112
    %v430 = vpop.permute.xlu0 %429
    %v432 = vmul.f32 %v425, %v430
    %434 = vrot.lane.b32.xlu0 %v432, 8
    %v435 = vpop.permute.xlu0 %434
    %v437 = vadd.f32 %v427, %v435
    %v438 = vtanh.pop %v437
    %440 = vrot.lane.b32.xlu0 %v438, 16
    %v441 = vpop.permute.xlu0 %440
    %v443 = vmul.f32 %v425, %v441
    %s444 = scalar_lea.vmem [#allocation4], 24
    %v445 = vld [vmem:[%s444] sm:$0xf]
    %447 = vrot.lane.b32.xlu0 %v443, 104
    %v448 = vpop.permute.xlu0 %447
    %v449 = vsel %vm53, %v448, 0
    %451 = vmatpush.msra.mxu0 0.0
    %452 = vmatpush.msra.mxu0 0.0
    %453 = vmatpush.msra.mxu0 0.0
    %454 = vmatpush.msra.mxu0 0.0
    %455 = vmatpush.msra.mxu0 0.0
    %456 = vmatpush.msra.mxu0 0.0
    %457 = vmatpush.msra.mxu0 0.0
    %458 = vmatpush.msra.mxu0 0.0
    %459 = vmatpush.msra.mxu0 0.0
    %460 = vmatpush.msra.mxu0 0.0
    %461 = vmatpush.msra.mxu0 0.0
    %462 = vmatpush.msra.mxu0 0.0
    %463 = vmatpush.msra.mxu0 0.0
    %464 = vmatpush.msra.mxu0 0.0
    %465 = vmatpush.msra.mxu0 0.0
    %466 = vmatpush.msra.mxu0 %v49
    %467 = vmatmul.f32.gmra.mxu0 %v449
    %v468 = vpop.f32.mrf.mxu0
    %v469 = vadd.f32 0.0, %v468
    %470 = vdwg.mxu0
    %v471 = vadd.f32 %v445, %v469
    %v472 = vxor.u32 %v471, 2147483648
    %v473 = vmul.f32 %v472, 1.442695
    %v474 = vpow.pop %v473
    %v475 = vadd.f32 %v474, 1.0
    %v476 = vrcp.pop %v475
    %v477 = vmul.f32 %v475, %v476
    %v478 = vsub.f32 1.0, %v477
    %v479 = vmul.f32 %v476, %v478
    %v480 = vadd.f32 %v476, %v479
    %vm481 = vweird.f32 %v475
    %vm482 = vweird.f32 %v476
    %vm483 = vmor %vm481, %vm482
    %v484 = vsel %vm483, %v476, %v480
    %v485 = vand.u32 2147483647, %v475
    %vm486 = vcmp.eq.f32.partialorder %v485, 8.507059e+37
    %v487 = vand.u32 %v475, 2147483648
    %v488 = vor.u32 1.1754944e-38, %v487
    %v489 = vsel %vm486, %v488, %v484
    %v490 = vmul.f32 1.0, %v489
    %v491 = vtanh.pop %v471
    %v492 = vmul.f32 %v490, %v437
    %494 = vrot.lane.b32.xlu0 %v491, 112
    %v495 = vpop.permute.xlu0 %494
    %v497 = vmul.f32 %v490, %v495
    %499 = vrot.lane.b32.xlu0 %v497, 8
    %v500 = vpop.permute.xlu0 %499
    %v502 = vadd.f32 %v492, %v500
    %v503 = vtanh.pop %v502
    %505 = vrot.lane.b32.xlu0 %v503, 16
    %v506 = vpop.permute.xlu0 %505
    %v508 = vmul.f32 %v490, %v506
    %s509 = scalar_lea.vmem [#allocation4], 28
    %v510 = vld [vmem:[%s509] sm:$0xf]
    %512 = vrot.lane.b32.xlu0 %v508, 104
    %v513 = vpop.permute.xlu0 %512
    %v514 = vsel %vm53, %v513, 0
    %516 = vmatpush.msra.mxu0 0.0
    %517 = vmatpush.msra.mxu0 0.0
    %518 = vmatpush.msra.mxu0 0.0
    %519 = vmatpush.msra.mxu0 0.0
    %520 = vmatpush.msra.mxu0 0.0
    %521 = vmatpush.msra.mxu0 0.0
    %522 = vmatpush.msra.mxu0 0.0
    %523 = vmatpush.msra.mxu0 0.0
    %524 = vmatpush.msra.mxu0 0.0
    %525 = vmatpush.msra.mxu0 0.0
    %526 = vmatpush.msra.mxu0 0.0
    %527 = vmatpush.msra.mxu0 0.0
    %528 = vmatpush.msra.mxu0 0.0
    %529 = vmatpush.msra.mxu0 0.0
    %530 = vmatpush.msra.mxu0 0.0
    %531 = vmatpush.msra.mxu0 %v49
    %532 = vmatmul.f32.gmra.mxu0 %v514
    %v533 = vpop.f32.mrf.mxu0
    %v534 = vadd.f32 0.0, %v533
    %535 = vdwg.mxu0
    %v536 = vadd.f32 %v510, %v534
    %v537 = vxor.u32 %v536, 2147483648
    %v538 = vmul.f32 %v537, 1.442695
    %v539 = vpow.pop %v538
    %v540 = vadd.f32 %v539, 1.0
    %v541 = vrcp.pop %v540
    %v542 = vmul.f32 %v540, %v541
    %v543 = vsub.f32 1.0, %v542
    %v544 = vmul.f32 %v541, %v543
    %v545 = vadd.f32 %v541, %v544
    %vm546 = vweird.f32 %v540
    %vm547 = vweird.f32 %v541
    %vm548 = vmor %vm546, %vm547
    %v549 = vsel %vm548, %v541, %v545
    %v550 = vand.u32 2147483647, %v540
    %vm551 = vcmp.eq.f32.partialorder %v550, 8.507059e+37
    %v552 = vand.u32 %v540, 2147483648
    %v553 = vor.u32 1.1754944e-38, %v552
    %v554 = vsel %vm551, %v553, %v549
    %v555 = vmul.f32 1.0, %v554
    %v556 = vtanh.pop %v536
    %v557 = vmul.f32 %v555, %v502
    %559 = vrot.lane.b32.xlu0 %v556, 112
    %v560 = vpop.permute.xlu0 %559
    %v562 = vmul.f32 %v555, %v560
    %564 = vrot.lane.b32.xlu0 %v562, 8
    %v565 = vpop.permute.xlu0 %564
    %v567 = vadd.f32 %v557, %v565
    %v568 = vtanh.pop %v567
    %570 = vrot.lane.b32.xlu0 %v568, 16
    %v571 = vpop.permute.xlu0 %570
    %v573 = vmul.f32 %v555, %v571
    %575 = vrot.lane.b32.xlu0 %v573, 104
    %v576 = vpop.permute.xlu0 %575
    %vm578 = vcmask 60416
    %579 = vst.msk [vmem:[#allocation2] sm:$0xf] %vm578, %v576
    %581 = vrot.lane.b32.xlu0 %v567, 120
    %v582 = vpop.permute.xlu0 %581
    %584 = vst.msk [vmem:[#allocation3] sm:$0xf] %vm578, %v582
    // Predicated region
    $region22: #{tpu_custom_call.1} parent=1 // pred_check
      %p585 = pneg %p42
    $region23: #{tpu_custom_call.1} parent=1 // pred_check_branch
      %587 = sbr.rel (%p585) target = $region25
    $region24: #{tpu_custom_call.1} parent=1 // pred_region
      %588 = vst.msk [vmem:[#allocation9] sm:$0xf] %vm578, %v576
    $region25: #{tpu_custom_call.1} parent=1 // pred_fallthru
      _
    // Predicated region
    $region26: #{tpu_custom_call.1} parent=1 // pred_check
      _
    $region27: #{tpu_custom_call.1} parent=1 // pred_check_branch
      %590 = sbr.rel (0) target = $region29
    $region28: #{tpu_custom_call.1} parent=1 // pred_region
      %592 = vsyncadd [#allocation6], 0
      %s594 = sshll.u32 [#allocation9], 4
      %s595 = int_to_ptr.vmem [resolvable:$true] %s594
      %s596 = sshll.u32 %s2, 4
      %s597 = int_to_ptr.hbm [resolvable:$true] %s596
      %599 = dma.vmem_to_hbm [thread:$0]  %s595, 64, %s597, [#allocation6]
    $region29: #{tpu_custom_call.1} parent=1 // pred_fallthru
      _
    // Predicated region
    $region30: #{tpu_custom_call.1} parent=1 // pred_check
      _
    $region31: #{tpu_custom_call.1} parent=1 // pred_check_branch
      %601 = sbr.rel (0) target = $region33
    $region32: #{tpu_custom_call.1} parent=1 // pred_region
      %603 = dma.done [#allocation6], 64
    $region33: #{tpu_custom_call.1} parent=1 // pred_fallthru
      _
    %604 = vsyncpa [#allocation5], 1
    %605 = vsyncpa [#allocation8], 1
    %606 = vsyncpa [#allocation6], 1

</llo_original>
